<compile_context>
chip_gen: v7x
topology: tpu7x:2x2x1
jax: 0.10.0
libtpu: 0.0.40
codegen_flags: <defaults>
</compile_context>

<pallas_src>
import functools

import jax
import jax.numpy as jnp
from jax.experimental import pallas as pl
from jax.experimental.pallas import tpu as pltpu


def _ce_kernel(logits_ref, targets_ref, out_ref, acc_ref, *, total_rows):
    i = pl.program_id(0)

    @pl.when(i == 0)
    def _():
        acc_ref[...] = jnp.zeros_like(acc_ref)

    x = logits_ref[...].astype(jnp.float32)        # (tile_n, C)
    t = targets_ref[...].astype(jnp.float32)       # (tile_n, C)

    # Numerically stable log-softmax pieces along the class (lane) axis.
    # Avoid materializing logp:
    #   sum(t * (shifted - lse)) = sum(t * shifted) - lse * sum(t)
    m = jnp.max(x, axis=-1, keepdims=True)                             # (tile_n, 1)
    shifted = x - m                                                    # (tile_n, C)
    lse = jnp.log(jnp.sum(jnp.exp(shifted), axis=-1, keepdims=True))   # (tile_n, 1)

    t_dot_shifted = jnp.sum(t * shifted, axis=-1, keepdims=True)       # (tile_n, 1)
    t_sum = jnp.sum(t, axis=-1, keepdims=True)                         # (tile_n, 1)

    # Per-row (log_softmax * targets).sum(dim=class), accumulated as a vector.
    acc_ref[...] += t_dot_shifted - lse * t_sum                        # (tile_n, 1)

    @pl.when(i == pl.num_programs(0) - 1)
    def _():
        out_ref[0, 0] = -jnp.sum(acc_ref[...]) / jnp.float32(total_rows)


def _pick_tile_n(n_rows, n_cols, itemsize, vmem_budget_bytes=12 * 1024 * 1024):
    """Largest row tile (multiple of 8, <=1024) whose double-buffered inputs
    fit comfortably inside the default scoped-VMEM limit on all generations
    (v5e 16 MiB / v6e 32 MiB / v7x 32 MiB scoped)."""
    per_row_bytes = 2 * 2 * n_cols * itemsize          # 2 inputs x 2 pipeline bufs
    max_rows = max(8, vmem_budget_bytes // per_row_bytes)
    tile_n = int(min(1024, max_rows))
    tile_n = max(8, (tile_n // 8) * 8)                 # sublane multiple
    # Never tile more rows than the (sublane-rounded) batch actually has.
    tile_n = min(tile_n, ((n_rows + 7) // 8) * 8)
    return tile_n


def crossentropy_loss(logits, targets, *, tile_n=None):
    """Pallas equivalent of Crossentropy_Loss.forward for 2-D (N, C) inputs."""
    assert logits.shape == targets.shape
    N, C = logits.shape

    itemsize = max(jnp.dtype(logits.dtype).itemsize,
                   jnp.dtype(targets.dtype).itemsize)
    if tile_n is None:
        tile_n = _pick_tile_n(N, C, itemsize)
    else:
        tile_n = max(8, (int(tile_n) // 8) * 8)

    # Pad rows so the grid divides evenly.  Padded targets are zero, so the
    # padded rows contribute exactly zero to the accumulated sum; the mean is
    # still taken over the true N.
    n_pad = (-N) % tile_n
    if n_pad:
        logits = jnp.pad(logits, ((0, n_pad), (0, 0)))
        targets = jnp.pad(targets, ((0, n_pad), (0, 0)))
    n_padded = N + n_pad

    kernel = functools.partial(_ce_kernel, total_rows=N)

    out = pl.pallas_call(
        kernel,
        out_shape=jax.ShapeDtypeStruct((1, 1), jnp.float32),
        grid_spec=pltpu.PrefetchScalarGridSpec(
            num_scalar_prefetch=0,
            grid=(n_padded // tile_n,),
            in_specs=[
                pl.BlockSpec((tile_n, C), lambda i: (i, 0)),
                pl.BlockSpec((tile_n, C), lambda i: (i, 0)),
            ],
            out_specs=pl.BlockSpec(memory_space=pltpu.MemorySpace.SMEM),
            scratch_shapes=[pltpu.VMEM((tile_n, 1), jnp.float32)],
        ),
        compiler_params=pltpu.CompilerParams(
            # Grid axis carries the running accumulator -> must be sequential.
            dimension_semantics=("arbitrary",),
        ),
    )(logits, targets)
    return out[0, 0]


def _reference(logits, targets):
    logp = jax.nn.log_softmax(logits.astype(jnp.float32), axis=1)
    return -jnp.mean(jnp.sum(logp * targets.astype(jnp.float32), axis=1))


if __name__ == "__main__":
    key = jax.random.PRNGKey(0)
    k1, k2 = jax.random.split(key)

    N, C = 64, 128  # small batch of rows, class axis lane-aligned
    logits = jax.random.normal(k1, (N, C), dtype=jnp.float32)
    # Soft targets: a proper probability distribution per row.
    targets = jax.nn.softmax(jax.random.normal(k2, (N, C), dtype=jnp.float32), axis=1)

    loss = crossentropy_loss(logits, targets)
    loss = jax.block_until_ready(loss)

    ref = _reference(logits, targets)
    assert jnp.allclose(loss, ref, rtol=1e-5, atol=1e-5), (loss, ref)

    # Also exercise the multi-tile + remainder path (N not a multiple of the tile).
    N2, C2 = 300, 256
    k3, k4 = jax.random.split(k2)
    logits2 = jax.random.normal(k3, (N2, C2), dtype=jnp.float32)
    targets2 = jax.nn.softmax(jax.random.normal(k4, (N2, C2), dtype=jnp.float32), axis=1)
    loss2 = jax.block_until_ready(crossentropy_loss(logits2, targets2, tile_n=128))
    ref2 = _reference(logits2, targets2)
    assert jnp.allclose(loss2, ref2, rtol=1e-5, atol=1e-5), (loss2, ref2)

    print("KERNEL_OK")
</pallas_src>

<mosaic_0001>
module attributes {stable_mosaic.version = 11 : i64} {
  func.func @_ce_kernel(%arg0: i32, %arg1: memref<64x128xf32, #tpu.memory_space<vmem>>, %arg2: memref<64x128xf32, #tpu.memory_space<vmem>>, %arg3: memref<1x1xf32, #tpu.memory_space<smem>>, %arg4: memref<64x1xf32, #tpu.memory_space<vmem>>) attributes {dimension_semantics = [#tpu.dimension_semantics<arbitrary>], iteration_bounds = array<i64: 1>, scalar_prefetch = 0 : i64, scratch_operands = 1 : i64, tpu.core_type = #tpu.core_type<tc>, window_params = [{transform_indices = @transform_0, window_bounds = array<i64: 64, 128>}, {transform_indices = @transform_1, window_bounds = array<i64: 64, 128>}, {transform_indices = @transform_2, window_bounds = array<i64: 1, 1>}]} {
    %c0_i32 = arith.constant 0 : i32
    %0 = arith.cmpi eq, %arg0, %c0_i32 : i32
    %1 = arith.extui %0 : i1 to i32
    %c0_i32_0 = arith.constant 0 : i32
    %2 = arith.cmpi ne, %1, %c0_i32_0 : i32
    scf.if %2 {
      %cst_13 = arith.constant 0.000000e+00 : f32
      %26 = vector.broadcast %cst_13 : f32 to vector<64x1xf32>
      %c0_14 = arith.constant 0 : index
      %c0_15 = arith.constant 0 : index
      %27 = vector.load %arg4[%c0_14, %c0_15] : memref<64x1xf32, #tpu.memory_space<vmem>>, vector<64x1xf32>
      tpu.vector_store %arg4[%c0_14, %c0_15], %26 {strides = array<i32>} : memref<64x1xf32, #tpu.memory_space<vmem>>, vector<64x1xf32>,
    } else {
    }
    %c0 = arith.constant 0 : index
    %c0_1 = arith.constant 0 : index
    %3 = vector.load %arg1[%c0, %c0_1] : memref<64x128xf32, #tpu.memory_space<vmem>>, vector<64x128xf32>
    %c0_2 = arith.constant 0 : index
    %c0_3 = arith.constant 0 : index
    %4 = vector.load %arg2[%c0_2, %c0_3] : memref<64x128xf32, #tpu.memory_space<vmem>>, vector<64x128xf32>
    %cst = arith.constant dense<0xFF800000> : vector<64xf32>
    %5 = vector.multi_reduction <maximumf>, %3, %cst [1] : vector<64x128xf32> to vector<64xf32>
    %6 = vector.shape_cast %5 : vector<64xf32> to vector<64x1xf32>
    %7 = vector.broadcast %6 : vector<64x1xf32> to vector<64x128xf32>
    %8 = arith.subf %3, %7 : vector<64x128xf32>
    %9 = math.exp %8 : vector<64x128xf32>
    %cst_4 = arith.constant dense<0.000000e+00> : vector<64xf32>
    %10 = vector.multi_reduction <add>, %9, %cst_4 [1] : vector<64x128xf32> to vector<64xf32>
    %11 = vector.shape_cast %10 : vector<64xf32> to vector<64x1xf32>
    %12 = math.log %11 : vector<64x1xf32>
    %13 = arith.mulf %4, %8 : vector<64x128xf32>
    %cst_5 = arith.constant dense<0.000000e+00> : vector<64xf32>
    %14 = vector.multi_reduction <add>, %13, %cst_5 [1] : vector<64x128xf32> to vector<64xf32>
    %15 = vector.shape_cast %14 : vector<64xf32> to vector<64x1xf32>
    %cst_6 = arith.constant dense<0.000000e+00> : vector<64xf32>
    %16 = vector.multi_reduction <add>, %4, %cst_6 [1] : vector<64x128xf32> to vector<64xf32>
    %17 = vector.shape_cast %16 : vector<64xf32> to vector<64x1xf32>
    %c0_7 = arith.constant 0 : index
    %c0_8 = arith.constant 0 : index
    %18 = vector.load %arg4[%c0_7, %c0_8] : memref<64x1xf32, #tpu.memory_space<vmem>>, vector<64x1xf32>
    %19 = arith.mulf %12, %17 : vector<64x1xf32>
    %20 = arith.subf %15, %19 : vector<64x1xf32>
    %21 = arith.addf %18, %20 : vector<64x1xf32>
    %c0_9 = arith.constant 0 : index
    %c0_10 = arith.constant 0 : index
    %22 = vector.load %arg4[%c0_9, %c0_10] : memref<64x1xf32, #tpu.memory_space<vmem>>, vector<64x1xf32>
    tpu.vector_store %arg4[%c0_9, %c0_10], %21 {strides = array<i32>} : memref<64x1xf32, #tpu.memory_space<vmem>>, vector<64x1xf32>,
    %c0_i32_11 = arith.constant 0 : i32
    %23 = arith.cmpi eq, %arg0, %c0_i32_11 : i32
    %24 = arith.extui %23 : i1 to i32
    %c0_i32_12 = arith.constant 0 : i32
    %25 = arith.cmpi ne, %24, %c0_i32_12 : i32
    scf.if %25 {
      %c0_13 = arith.constant 0 : index
      %c0_14 = arith.constant 0 : index
      %26 = vector.load %arg4[%c0_13, %c0_14] : memref<64x1xf32, #tpu.memory_space<vmem>>, vector<64x1xf32>
      %27 = vector.shape_cast %26 : vector<64x1xf32> to vector<1x64x1xf32>
      %cst_15 = arith.constant dense<0.000000e+00> : vector<1xf32>
      %28 = vector.multi_reduction <add>, %27, %cst_15 [1, 2] : vector<1x64x1xf32> to vector<1xf32>
      %29 = vector.shape_cast %28 : vector<1xf32> to vector<1x1x1xf32>
      %30 = vector.extract %29[0, 0, 0] : f32 from vector<1x1x1xf32>
      %cst_16 = arith.constant 0.000000e+00 : f32
      %31 = arith.subf %cst_16, %30 : f32
      %cst_17 = arith.constant 6.400000e+01 : f32
      %32 = arith.divf %31, %cst_17 : f32
      %c0_18 = arith.constant 0 : index
      %c0_19 = arith.constant 0 : index
      %33 = memref.load %arg3[%c0_18, %c0_19] : memref<1x1xf32, #tpu.memory_space<smem>>
      memref.store %32, %arg3[%c0_18, %c0_19] : memref<1x1xf32, #tpu.memory_space<smem>>
    } else {
    }
    return
  }
  func.func @transform_0(%arg0: i32) -> (i32, i32) {
    %c0_i32 = arith.constant 0 : i32
    %c0_i32_0 = arith.constant 0 : i32
    return %arg0, %c0_i32 : i32, i32
  }
  func.func @transform_1(%arg0: i32) -> (i32, i32) {
    %c0_i32 = arith.constant 0 : i32
    %c0_i32_0 = arith.constant 0 : i32
    return %arg0, %c0_i32 : i32, i32
  }
  func.func @transform_2(%arg0: i32) -> (i32, i32) {
    %c0_i32 = arith.constant 0 : i32
    %c0_i32_0 = arith.constant 0 : i32
    %c0_i32_1 = arith.constant 0 : i32
    return %c0_i32, %c0_i32_0 : i32, i32
  }
}

</mosaic_0001>

<llo_original>
// kernel: tpu_custom_call.1
$region0: #{tpu_custom_call.1}
  #allocation0 [shape = 'u32[]', space=smem, size = 0x4, offset = 0x4, fixed_abs, tag = 'smem constant byte address 0x4 - core index']
  #allocation1 [shape = 'u32[144,128]{1,0:T(1,128)}', space=vmem, size = 0x12000, scoped, tag = 'internal scratch']
  #allocation2 [shape = 'f32[64,1]{1,0:T(8,128)}', space=vmem, size = 0x8000, scoped, tag = 'scratch operand']
  %s0 = inlined_call_operand.hbm [shape: f32[64,128], index: 0, kind: input, shape index: {}]
  %s1 = inlined_call_operand.hbm [shape: f32[64,128], index: 1, kind: input, shape index: {}]
  %s2 = inlined_call_operand.hbm [shape: f32[1,1], index: 2, kind: output, shape index: {}]
  %s3 = sld [smem:[#allocation0]]
  $region34: #{tpu_custom_call.1} parent=0
    _
  %s5 = ssub.s32 1, %s3
  %s6 = scalar_select 0, %s5, %s3
  $region1: #{tpu_custom_call.1} parent=0
    #allocation3 [shape = 'u8[32768]{0}', space=vmem, size = 0x8000, scoped, tag = 'input window, operand 0, single buffered']
    #allocation4 [shape = 's32[1]{0}', space=sflag, size = 0x4, scoped, tag = 'scoped memory for tpu_custom_call.1']
    #allocation5 [shape = 's32[1]{0}', space=sflag, size = 0x4, scoped, tag = 'scoped memory for tpu_custom_call.1']
    #allocation6 [shape = 'u8[32768]{0}', space=vmem, size = 0x8000, scoped, tag = 'input window, operand 1, single buffered']
    #allocation7 [shape = 's32[1]{0}', space=sflag, size = 0x4, scoped, tag = 'scoped memory for tpu_custom_call.1']
    #allocation8 [shape = 'u8[512]{0}', space=smem, size = 0x200, scoped, tag = 'output window, operand 0, single buffered']
    %7 = vsyncpa [#allocation4], 0
    %8 = vsyncpa [#allocation7], 0
    %9 = vsyncpa [#allocation5], 0
    // Predicated region
    $region2: #{tpu_custom_call.1} parent=1 // pred_check
      _
    $region3: #{tpu_custom_call.1} parent=1 // pred_check_branch
      %11 = sbr.rel (0) target = $region5
    $region4: #{tpu_custom_call.1} parent=1 // pred_region
      %s13 = ssub.s32 1024, 1024
      %14 = vsyncadd [#allocation4], %s13
      %s15 = sshll.u32 [#allocation3], 4
      %s16 = int_to_ptr.vmem [resolvable:$true] %s15
      %21 = dma.hbm_to_vmem [thread:$0]  %s0, 1024, %s16, [#allocation4], 128, 128, 8
    $region5: #{tpu_custom_call.1} parent=1 // pred_fallthru
      _
    // Predicated region
    $region6: #{tpu_custom_call.1} parent=1 // pred_check
      _
    $region7: #{tpu_custom_call.1} parent=1 // pred_check_branch
      %23 = sbr.rel (0) target = $region9
    $region8: #{tpu_custom_call.1} parent=1 // pred_region
      %s25 = ssub.s32 1024, 1024
      %26 = vsyncadd [#allocation7], %s25
      %s27 = sshll.u32 [#allocation6], 4
      %s28 = int_to_ptr.vmem [resolvable:$true] %s27
      %33 = dma.hbm_to_vmem [thread:$0]  %s1, 1024, %s28, [#allocation7], 128, 128, 8
    $region9: #{tpu_custom_call.1} parent=1 // pred_fallthru
      _
    // Predicated region
    $region10: #{tpu_custom_call.1} parent=1 // pred_check
      _
    $region11: #{tpu_custom_call.1} parent=1 // pred_check_branch
      %35 = sbr.rel (0) target = $region13
    $region12: #{tpu_custom_call.1} parent=1 // pred_region
      %36 = dma.done [#allocation4], 1024
    $region13: #{tpu_custom_call.1} parent=1 // pred_fallthru
      _
    // Predicated region
    $region14: #{tpu_custom_call.1} parent=1 // pred_check
      _
    $region15: #{tpu_custom_call.1} parent=1 // pred_check_branch
      %38 = sbr.rel (0) target = $region17
    $region16: #{tpu_custom_call.1} parent=1 // pred_region
      %39 = dma.done [#allocation7], 1024
    $region17: #{tpu_custom_call.1} parent=1 // pred_fallthru
      _
    %p40 = scmp.eq.s32.totalorder 0, 0
    // Predicated region
    $region18: #{tpu_custom_call.1} parent=1 // pred_check
      %p41 = pneg %p40
    $region19: #{tpu_custom_call.1} parent=1 // pred_check_branch
      %43 = sbr.rel (%p41) target = $region21
    $region20: #{tpu_custom_call.1} parent=1 // pred_region
      %vm44 = vcmask 7168
      %45 = vst.msk [vmem:[#allocation2] sm:$0xff] %vm44, 0.0
      %46 = vst.msk [vmem:[#allocation2 + $0x8] sm:$0xff] %vm44, 0.0
      %47 = vst.msk [vmem:[#allocation2 + $0x10] sm:$0xff] %vm44, 0.0
      %48 = vst.msk [vmem:[#allocation2 + $0x18] sm:$0xff] %vm44, 0.0
      %49 = vst.msk [vmem:[#allocation2 + $0x20] sm:$0xff] %vm44, 0.0
      %50 = vst.msk [vmem:[#allocation2 + $0x28] sm:$0xff] %vm44, 0.0
      %51 = vst.msk [vmem:[#allocation2 + $0x30] sm:$0xff] %vm44, 0.0
      %52 = vst.msk [vmem:[#allocation2 + $0x38] sm:$0xff] %vm44, 0.0
    $region21: #{tpu_custom_call.1} parent=1 // pred_fallthru
      _
    %v53 = vld [vmem:[#allocation3] sm:$0xff]
    %v54 = vld [vmem:[#allocation3 + $0x8] sm:$0xff]
    %v55 = vld [vmem:[#allocation3 + $0x10] sm:$0xff]
    %v56 = vld [vmem:[#allocation3 + $0x18] sm:$0xff]
    %v57 = vld [vmem:[#allocation3 + $0x20] sm:$0xff]
    %v58 = vld [vmem:[#allocation3 + $0x28] sm:$0xff]
    %v59 = vld [vmem:[#allocation3 + $0x30] sm:$0xff]
    %v60 = vld [vmem:[#allocation3 + $0x38] sm:$0xff]
    %v61 = vld [vmem:[#allocation6] sm:$0xff]
    %v62 = vld [vmem:[#allocation6 + $0x8] sm:$0xff]
    %v63 = vld [vmem:[#allocation6 + $0x10] sm:$0xff]
    %v64 = vld [vmem:[#allocation6 + $0x18] sm:$0xff]
    %v65 = vld [vmem:[#allocation6 + $0x20] sm:$0xff]
    %v66 = vld [vmem:[#allocation6 + $0x28] sm:$0xff]
    %v67 = vld [vmem:[#allocation6 + $0x30] sm:$0xff]
    %v68 = vld [vmem:[#allocation6 + $0x38] sm:$0xff]
    %69 = vmax.xlane.f32.xlu0 %v53
    %v70 = vpop.xlane.xlu0 %69
    %71 = vmax.xlane.f32.xlu0 %v54
    %v72 = vpop.xlane.xlu0 %71
    %73 = vmax.xlane.f32.xlu0 %v55
    %v74 = vpop.xlane.xlu0 %73
    %75 = vmax.xlane.f32.xlu0 %v56
    %v76 = vpop.xlane.xlu0 %75
    %77 = vmax.xlane.f32.xlu0 %v57
    %v78 = vpop.xlane.xlu0 %77
    %79 = vmax.xlane.f32.xlu0 %v58
    %v80 = vpop.xlane.xlu0 %79
    %81 = vmax.xlane.f32.xlu0 %v59
    %v82 = vpop.xlane.xlu0 %81
    %83 = vmax.xlane.f32.xlu0 %v60
    %v84 = vpop.xlane.xlu0 %83
    %v85 = vsub.f32 %v53, %v70
    %v86 = vsub.f32 %v54, %v72
    %v87 = vsub.f32 %v55, %v74
    %v88 = vsub.f32 %v56, %v76
    %v89 = vsub.f32 %v57, %v78
    %v90 = vsub.f32 %v58, %v80
    %v91 = vsub.f32 %v59, %v82
    %v92 = vsub.f32 %v60, %v84
    %v93 = vmul.f32 %v85, 1.442695
    %v94 = vpow.pop %v93
    %v95 = vmul.f32 %v86, 1.442695
    %v96 = vpow.pop %v95
    %v97 = vmul.f32 %v87, 1.442695
    %v98 = vpow.pop %v97
    %v99 = vmul.f32 %v88, 1.442695
    %v100 = vpow.pop %v99
    %v101 = vmul.f32 %v89, 1.442695
    %v102 = vpow.pop %v101
    %v103 = vmul.f32 %v90, 1.442695
    %v104 = vpow.pop %v103
    %v105 = vmul.f32 %v91, 1.442695
    %v106 = vpow.pop %v105
    %v107 = vmul.f32 %v92, 1.442695
    %v108 = vpow.pop %v107
    %109 = vadd.xlane.f32.xlu0 %v94
    %v110 = vpop.xlane.xlu0 %109
    %111 = vadd.xlane.f32.xlu0 %v96
    %v112 = vpop.xlane.xlu0 %111
    %113 = vadd.xlane.f32.xlu0 %v98
    %v114 = vpop.xlane.xlu0 %113
    %115 = vadd.xlane.f32.xlu0 %v100
    %v116 = vpop.xlane.xlu0 %115
    %117 = vadd.xlane.f32.xlu0 %v102
    %v118 = vpop.xlane.xlu0 %117
    %119 = vadd.xlane.f32.xlu0 %v104
    %v120 = vpop.xlane.xlu0 %119
    %121 = vadd.xlane.f32.xlu0 %v106
    %v122 = vpop.xlane.xlu0 %121
    %123 = vadd.xlane.f32.xlu0 %v108
    %v124 = vpop.xlane.xlu0 %123
    %v125 = vlog2.pop %v110
    %v126 = vmul.f32 %v125, 0.6931472
    %v127 = vlog2.pop %v112
    %v128 = vmul.f32 %v127, 0.6931472
    %v129 = vlog2.pop %v114
    %v130 = vmul.f32 %v129, 0.6931472
    %v131 = vlog2.pop %v116
    %v132 = vmul.f32 %v131, 0.6931472
    %v133 = vlog2.pop %v118
    %v134 = vmul.f32 %v133, 0.6931472
    %v135 = vlog2.pop %v120
    %v136 = vmul.f32 %v135, 0.6931472
    %v137 = vlog2.pop %v122
    %v138 = vmul.f32 %v137, 0.6931472
    %v139 = vlog2.pop %v124
    %v140 = vmul.f32 %v139, 0.6931472
    %v141 = vmul.f32 %v61, %v85
    %v142 = vmul.f32 %v62, %v86
    %v143 = vmul.f32 %v63, %v87
    %v144 = vmul.f32 %v64, %v88
    %v145 = vmul.f32 %v65, %v89
    %v146 = vmul.f32 %v66, %v90
    %v147 = vmul.f32 %v67, %v91
    %v148 = vmul.f32 %v68, %v92
    %149 = vadd.xlane.f32.xlu0 %v141
    %v150 = vpop.xlane.xlu0 %149
    %151 = vadd.xlane.f32.xlu0 %v142
    %v152 = vpop.xlane.xlu0 %151
    %153 = vadd.xlane.f32.xlu0 %v143
    %v154 = vpop.xlane.xlu0 %153
    %155 = vadd.xlane.f32.xlu0 %v144
    %v156 = vpop.xlane.xlu0 %155
    %157 = vadd.xlane.f32.xlu0 %v145
    %v158 = vpop.xlane.xlu0 %157
    %159 = vadd.xlane.f32.xlu0 %v146
    %v160 = vpop.xlane.xlu0 %159
    %161 = vadd.xlane.f32.xlu0 %v147
    %v162 = vpop.xlane.xlu0 %161
    %163 = vadd.xlane.f32.xlu0 %v148
    %v164 = vpop.xlane.xlu0 %163
    %165 = vadd.xlane.f32.xlu0 %v61
    %v166 = vpop.xlane.xlu0 %165
    %167 = vadd.xlane.f32.xlu0 %v62
    %v168 = vpop.xlane.xlu0 %167
    %169 = vadd.xlane.f32.xlu0 %v63
    %v170 = vpop.xlane.xlu0 %169
    %171 = vadd.xlane.f32.xlu0 %v64
    %v172 = vpop.xlane.xlu0 %171
    %173 = vadd.xlane.f32.xlu0 %v65
    %v174 = vpop.xlane.xlu0 %173
    %175 = vadd.xlane.f32.xlu0 %v66
    %v176 = vpop.xlane.xlu0 %175
    %177 = vadd.xlane.f32.xlu0 %v67
    %v178 = vpop.xlane.xlu0 %177
    %179 = vadd.xlane.f32.xlu0 %v68
    %v180 = vpop.xlane.xlu0 %179
    %v181 = vld [vmem:[#allocation2] sm:$0xff]
    %v182 = vld [vmem:[#allocation2 + $0x8] sm:$0xff]
    %v183 = vld [vmem:[#allocation2 + $0x10] sm:$0xff]
    %v184 = vld [vmem:[#allocation2 + $0x18] sm:$0xff]
    %v185 = vld [vmem:[#allocation2 + $0x20] sm:$0xff]
    %v186 = vld [vmem:[#allocation2 + $0x28] sm:$0xff]
    %v187 = vld [vmem:[#allocation2 + $0x30] sm:$0xff]
    %v188 = vld [vmem:[#allocation2 + $0x38] sm:$0xff]
    %v189 = vmul.f32 %v126, %v166
    %v190 = vmul.f32 %v128, %v168
    %v191 = vmul.f32 %v130, %v170
    %v192 = vmul.f32 %v132, %v172
    %v193 = vmul.f32 %v134, %v174
    %v194 = vmul.f32 %v136, %v176
    %v195 = vmul.f32 %v138, %v178
    %v196 = vmul.f32 %v140, %v180
    %v197 = vsub.f32 %v150, %v189
    %v198 = vsub.f32 %v152, %v190
    %v199 = vsub.f32 %v154, %v191
    %v200 = vsub.f32 %v156, %v192
    %v201 = vsub.f32 %v158, %v193
    %v202 = vsub.f32 %v160, %v194
    %v203 = vsub.f32 %v162, %v195
    %v204 = vsub.f32 %v164, %v196
    %v205 = vadd.f32 %v181, %v197
    %v206 = vadd.f32 %v182, %v198
    %v207 = vadd.f32 %v183, %v199
    %v208 = vadd.f32 %v184, %v200
    %v209 = vadd.f32 %v185, %v201
    %v210 = vadd.f32 %v186, %v202
    %v211 = vadd.f32 %v187, %v203
    %v212 = vadd.f32 %v188, %v204
    %vm213 = vcmask 7168
    %214 = vst.msk [vmem:[#allocation2] sm:$0xff] %vm213, %v205
    %215 = vst.msk [vmem:[#allocation2 + $0x8] sm:$0xff] %vm213, %v206
    %216 = vst.msk [vmem:[#allocation2 + $0x10] sm:$0xff] %vm213, %v207
    %217 = vst.msk [vmem:[#allocation2 + $0x18] sm:$0xff] %vm213, %v208
    %218 = vst.msk [vmem:[#allocation2 + $0x20] sm:$0xff] %vm213, %v209
    %219 = vst.msk [vmem:[#allocation2 + $0x28] sm:$0xff] %vm213, %v210
    %220 = vst.msk [vmem:[#allocation2 + $0x30] sm:$0xff] %vm213, %v211
    %221 = vst.msk [vmem:[#allocation2 + $0x38] sm:$0xff] %vm213, %v212
    // Predicated region
    $region22: #{tpu_custom_call.1} parent=1 // pred_check
      %p222 = pneg %p40
    $region23: #{tpu_custom_call.1} parent=1 // pred_check_branch
      %224 = sbr.rel (%p222) target = $region25
    $region24: #{tpu_custom_call.1} parent=1 // pred_region
      %v225 = vld [vmem:[#allocation2] sm:$0xff]
      %v226 = vld [vmem:[#allocation2 + $0x8] sm:$0xff]
      %v227 = vld [vmem:[#allocation2 + $0x10] sm:$0xff]
      %v228 = vld [vmem:[#allocation2 + $0x18] sm:$0xff]
      %v229 = vld [vmem:[#allocation2 + $0x20] sm:$0xff]
      %v230 = vld [vmem:[#allocation2 + $0x28] sm:$0xff]
      %v231 = vld [vmem:[#allocation2 + $0x30] sm:$0xff]
      %v232 = vld [vmem:[#allocation2 + $0x38] sm:$0xff]
      %v233 = vsel %vm213, %v225, 0.0
      %v234 = vsel %vm213, %v226, 0.0
      %v235 = vadd.f32 %v233, %v234
      %v236 = vsel %vm213, %v227, 0.0
      %v237 = vadd.f32 %v235, %v236
      %v238 = vsel %vm213, %v228, 0.0
      %v239 = vadd.f32 %v237, %v238
      %v240 = vsel %vm213, %v229, 0.0
      %v241 = vadd.f32 %v239, %v240
      %v242 = vsel %vm213, %v230, 0.0
      %v243 = vadd.f32 %v241, %v242
      %v244 = vsel %vm213, %v231, 0.0
      %v245 = vadd.f32 %v243, %v244
      %v246 = vsel %vm213, %v232, 0.0
      %v247 = vadd.f32 %v245, %v246
      %248 = vadd.xlane.f32.xlu0 %v247
      %v249 = vpop.xlane.xlu0 %248
      %v250 = vrot.slane %v249, 4
      %v251 = vadd.f32 %v249, %v250
      %v252 = vrot.slane %v251, 2
      %v253 = vadd.f32 %v251, %v252
      %v254 = vrot.slane %v253, 1
      %v255 = vadd.f32 %v253, %v254
      %s256 = vtos %v255
      %s257 = ssub.f32 0.0, %s256
      %v258 = vrcp.pop 64.0
      %s259 = vtos %v258
      %s260 = smul.f32 %s257, %s259
      %s261 = scalar_lea.smem [#allocation8], 0
      %262 = sst [smem:[%s261]] %s260
    $region25: #{tpu_custom_call.1} parent=1 // pred_fallthru
      _
    // Predicated region
    $region26: #{tpu_custom_call.1} parent=1 // pred_check
      _
    $region27: #{tpu_custom_call.1} parent=1 // pred_check_branch
      %264 = sbr.rel (0) target = $region29
    $region28: #{tpu_custom_call.1} parent=1 // pred_region
      %s266 = ssub.s32 16, 16
      %267 = vsyncadd [#allocation5], %s266
      %270 = dma.smem_to_hbm [#allocation8], 16, %s2, [#allocation5]
    $region29: #{tpu_custom_call.1} parent=1 // pred_fallthru
      _
    // Predicated region
    $region30: #{tpu_custom_call.1} parent=1 // pred_check
      _
    $region31: #{tpu_custom_call.1} parent=1 // pred_check_branch
      %272 = sbr.rel (0) target = $region33
    $region32: #{tpu_custom_call.1} parent=1 // pred_region
      %273 = dma.done [#allocation5], 16
    $region33: #{tpu_custom_call.1} parent=1 // pred_fallthru
      _
    %274 = sfence
    %275 = vsyncpa [#allocation4], 1
    %276 = vsyncpa [#allocation7], 1
    %277 = vsyncpa [#allocation5], 1

</llo_original>
